<compile_context>
chip_gen: v7x
topology: tpu7x:2x2x1
jax: 0.10.0
libtpu: 0.0.40
codegen_flags: <defaults>
</compile_context>

<pallas_src>
import jax
import jax.numpy as jnp
from jax.experimental import pallas as pl
from jax.experimental.pallas import tpu as pltpu


def _round_up(n: int, m: int) -> int:
    return ((n + m - 1) // m) * m


def _ffn_kernel(x_ref, w1_ref, b1_ref, w2_ref, b2_ref, o_ref, acc_ref):
    """One (row-tile, d_ff-tile) step of y = relu(x@w1+b1) @ w2 + b2."""
    k = pl.program_id(1)

    # Fold b2 into accumulator init (saves one full-tile VPU add per output tile).
    @pl.when(k == 0)
    def _():
        acc_ref[...] = jnp.broadcast_to(
            b2_ref[...].astype(jnp.float32), acc_ref.shape)

    # First GEMM chunk on the MXU, f32 accumulation; bias + ReLU on the VPU.
    h = jnp.dot(x_ref[...], w1_ref[...], preferred_element_type=jnp.float32)
    h = jnp.maximum(h + b1_ref[...].astype(jnp.float32), 0.0)
    # dropout (eval mode) -> identity

    # Second GEMM chunk, accumulate into the resident f32 scratch.
    acc_ref[...] += jnp.dot(h.astype(w2_ref.dtype), w2_ref[...],
                            preferred_element_type=jnp.float32)

    @pl.when(k == pl.num_programs(1) - 1)
    def _():
        o_ref[...] = acc_ref[...].astype(o_ref.dtype)


def positionwise_feed_forward(x, w1, b1, w2, b2, *,
                              block_m=256, block_k=512,
                              vmem_limit_bytes=None):
    """x: [B, S, dim_model] -> [B, S, dim_model].

    Weights are stored pre-transposed w.r.t. torch.nn.Linear:
      w1: [dim_model, d_ff], w2: [d_ff, dim_model]  so the kernel does x @ w.
    Low-precision (e.g. bf16) x / weights are supported; accumulation is f32.
    """
    B, S, D = x.shape
    d_ff = w1.shape[1]
    M = B * S

    # Lane-dense padding (multiples of 128 on minor dims) and tile sizing.
    D_pad = _round_up(D, 128)
    bk = min(block_k, _round_up(d_ff, 128))
    d_ff_pad = _round_up(d_ff, bk)
    bm = block_m if M >= block_m else _round_up(M, 8)
    M_pad = _round_up(M, bm)

    x2d = x.reshape(M, D)
    if (M_pad, D_pad) != (M, D):
        x2d = jnp.pad(x2d, ((0, M_pad - M), (0, D_pad - D)))
    w1p = w1 if (D_pad, d_ff_pad) == (D, d_ff) else jnp.pad(
        w1, ((0, D_pad - D), (0, d_ff_pad - d_ff)))
    w2p = w2 if (d_ff_pad, D_pad) == (d_ff, D) else jnp.pad(
        w2, ((0, d_ff_pad - d_ff), (0, D_pad - D)))
    b1p = jnp.pad(b1, (0, d_ff_pad - d_ff)).reshape(1, d_ff_pad)
    b2p = jnp.pad(b2, (0, D_pad - D)).reshape(1, D_pad)

    # VMEM budget: double-buffered tiles + f32 accumulator, with headroom.
    xb = jnp.dtype(x.dtype).itemsize
    wb = jnp.dtype(w1.dtype).itemsize
    est = (2 * bm * D_pad * xb          # x tiles
           + 2 * D_pad * bk * wb        # w1 tiles
           + 2 * 8 * bk * wb            # b1 tiles (sublane padded)
           + 2 * bk * D_pad * wb        # w2 tiles
           + 2 * 8 * D_pad * wb         # b2 tiles
           + 2 * bm * D_pad * xb        # out tiles
           + bm * D_pad * 4)            # accumulator scratch
    if vmem_limit_bytes is None:
        # Above the 16/32 MiB scoped defaults, under v7x's 64 MiB physical VMEM.
        vmem_limit_bytes = int(min(max(2 * est, 32 * 1024 * 1024),
                                   64 * 1024 * 1024))

    grid = (M_pad // bm, d_ff_pad // bk)

    cost = pl.CostEstimate(
        flops=4 * M_pad * D_pad * d_ff_pad,            # two GEMMs, 2*m*n*k each
        transcendentals=0,
        bytes_accessed=(2 * M_pad * D_pad * xb
                        + 2 * D_pad * d_ff_pad * wb
                        + (d_ff_pad + D_pad) * wb))

    out2d = pl.pallas_call(
        _ffn_kernel,
        out_shape=jax.ShapeDtypeStruct((M_pad, D_pad), x.dtype),
        grid_spec=pltpu.PrefetchScalarGridSpec(
            num_scalar_prefetch=0,
            grid=grid,
            in_specs=[
                pl.BlockSpec((bm, D_pad), lambda i, k: (i, 0)),   # x row tile
                pl.BlockSpec((D_pad, bk), lambda i, k: (0, k)),   # w1 d_ff tile
                pl.BlockSpec((1, bk),     lambda i, k: (0, k)),   # b1 d_ff tile
                pl.BlockSpec((bk, D_pad), lambda i, k: (k, 0)),   # w2 d_ff tile
                pl.BlockSpec((1, D_pad),  lambda i, k: (0, 0)),   # b2 (full)
            ],
            out_specs=pl.BlockSpec((bm, D_pad), lambda i, k: (i, 0)),
            scratch_shapes=[pltpu.VMEM((bm, D_pad), jnp.float32)],
        ),
        compiler_params=pltpu.CompilerParams(
            dimension_semantics=("parallel", "arbitrary"),
            vmem_limit_bytes=vmem_limit_bytes),
        cost_estimate=cost,
    )(x2d, w1p, b1p, w2p, b2p)

    return out2d[:M, :D].reshape(B, S, D)


def init_params(key, dim_model, d_ff, dtype=jnp.float32):
    """Deterministic init mimicking nn.Linear (uniform in +-1/sqrt(fan_in))."""
    k1, k2, k3, k4 = jax.random.split(key, 4)
    bound1 = 1.0 / (dim_model ** 0.5)
    bound2 = 1.0 / (d_ff ** 0.5)
    # Stored pre-transposed: w1 is [dim_model, d_ff], w2 is [d_ff, dim_model]
    w1 = jax.random.uniform(k1, (dim_model, d_ff), dtype, -bound1, bound1)
    b1 = jax.random.uniform(k2, (d_ff,), dtype, -bound1, bound1)
    w2 = jax.random.uniform(k3, (d_ff, dim_model), dtype, -bound2, bound2)
    b2 = jax.random.uniform(k4, (dim_model,), dtype, -bound2, bound2)
    return w1, b1, w2, b2


if __name__ == "__main__":
    key = jax.random.PRNGKey(0)
    k_x, k_p, k_x2, k_p2 = jax.random.split(key, 4)

    # Primary check: lane-aligned small transformer shapes, f32.
    batch, seq, dim_model, d_ff = 2, 8, 128, 256
    x = jax.random.normal(k_x, (batch, seq, dim_model), jnp.float32)
    w1, b1, w2, b2 = init_params(k_p, dim_model, d_ff)
    out = jax.block_until_ready(positionwise_feed_forward(x, w1, b1, w2, b2))
    y_ref = jnp.maximum(x @ w1 + b1, 0.0) @ w2 + b2
    assert out.shape == (batch, seq, dim_model)
    assert jnp.allclose(out, y_ref, atol=1e-4, rtol=1e-4)

    # Unaligned / ragged shapes exercise the padding path.
    b_o, s_o, dm_o, dff_o = 1, 5, 40, 72
    x_o = jax.random.normal(k_x2, (b_o, s_o, dm_o), jnp.float32)
    p_o = init_params(k_p2, dm_o, dff_o)
    out_o = jax.block_until_ready(positionwise_feed_forward(x_o, *p_o))
    y_ref_o = jnp.maximum(x_o @ p_o[0] + p_o[1], 0.0) @ p_o[2] + p_o[3]
    assert jnp.allclose(out_o, y_ref_o, atol=1e-4, rtol=1e-4)

    # bf16 activations/weights with f32 accumulation (MXU fast path).
    x_b = x.astype(jnp.bfloat16)
    p_b = tuple(p.astype(jnp.bfloat16) for p in (w1, b1, w2, b2))
    out_b = jax.block_until_ready(positionwise_feed_forward(x_b, *p_b))
    r = tuple(p.astype(jnp.float32) for p in (x_b,) + p_b)
    y_ref_b = jnp.maximum(r[0] @ r[1] + r[2], 0.0) @ r[3] + r[4]
    assert jnp.allclose(out_b.astype(jnp.float32), y_ref_b, atol=0.1, rtol=0.05)

    # Multi-tile reduction path: d_ff spans several bk tiles (accumulator loop).
    dm_l, dff_l = 128, 1536
    x_l = jax.random.normal(k_x, (2, 16, dm_l), jnp.float32)
    p_l = init_params(k_p, dm_l, dff_l)
    out_l = jax.block_until_ready(positionwise_feed_forward(x_l, *p_l))
    y_ref_l = jnp.maximum(x_l @ p_l[0] + p_l[1], 0.0) @ p_l[2] + p_l[3]
    assert jnp.allclose(out_l, y_ref_l, atol=1e-3, rtol=1e-3)

    print("KERNEL_OK")
</pallas_src>

<mosaic_0001>
module attributes {stable_mosaic.version = 11 : i64} {
  func.func @_ffn_kernel(%arg0: i32, %arg1: i32, %arg2: memref<16x128xf32, #tpu.memory_space<vmem>>, %arg3: memref<128x256xf32, #tpu.memory_space<vmem>>, %arg4: memref<1x256xf32, #tpu.memory_space<vmem>>, %arg5: memref<256x128xf32, #tpu.memory_space<vmem>>, %arg6: memref<1x128xf32, #tpu.memory_space<vmem>>, %arg7: memref<16x128xf32, #tpu.memory_space<vmem>>, %arg8: memref<16x128xf32, #tpu.memory_space<vmem>>) attributes {dimension_semantics = [#tpu.dimension_semantics<parallel>, #tpu.dimension_semantics<arbitrary>], iteration_bounds = array<i64: 1, 1>, scalar_prefetch = 0 : i64, scratch_operands = 1 : i64, tpu.core_type = #tpu.core_type<tc>, window_params = [{transform_indices = @transform_0, window_bounds = array<i64: 16, 128>}, {transform_indices = @transform_1, window_bounds = array<i64: 128, 256>}, {transform_indices = @transform_2, window_bounds = array<i64: 1, 256>}, {transform_indices = @transform_3, window_bounds = array<i64: 256, 128>}, {pipeline_mode = #tpu.pipeline_mode<synchronous>, transform_indices = @transform_4, window_bounds = array<i64: 1, 128>}, {transform_indices = @transform_5, window_bounds = array<i64: 16, 128>}]} {
    %c0_i32 = arith.constant 0 : i32
    %0 = arith.cmpi eq, %arg1, %c0_i32 : i32
    %1 = arith.extui %0 : i1 to i32
    %c0_i32_0 = arith.constant 0 : i32
    %2 = arith.cmpi ne, %1, %c0_i32_0 : i32
    scf.if %2 {
      %c0_16 = arith.constant 0 : index
      %c0_17 = arith.constant 0 : index
      %19 = vector.load %arg6[%c0_16, %c0_17] : memref<1x128xf32, #tpu.memory_space<vmem>>, vector<1x128xf32>
      %20 = vector.shape_cast %19 : vector<1x128xf32> to vector<1x128xf32>
      %21 = vector.broadcast %20 : vector<1x128xf32> to vector<16x128xf32>
      %c0_18 = arith.constant 0 : index
      %c0_19 = arith.constant 0 : index
      %22 = vector.load %arg8[%c0_18, %c0_19] : memref<16x128xf32, #tpu.memory_space<vmem>>, vector<16x128xf32>
      tpu.vector_store %arg8[%c0_18, %c0_19], %21 {strides = array<i32>} : memref<16x128xf32, #tpu.memory_space<vmem>>, vector<16x128xf32>,
    } else {
    }
    %c0 = arith.constant 0 : index
    %c0_1 = arith.constant 0 : index
    %3 = vector.load %arg2[%c0, %c0_1] : memref<16x128xf32, #tpu.memory_space<vmem>>, vector<16x128xf32>
    %c0_2 = arith.constant 0 : index
    %c0_3 = arith.constant 0 : index
    %4 = vector.load %arg3[%c0_2, %c0_3] : memref<128x256xf32, #tpu.memory_space<vmem>>, vector<128x256xf32>
    %cst = arith.constant dense<0.000000e+00> : vector<16x256xf32>
    %5 = tpu.matmul %3, %4, %cst {dimension_numbers = #tpu.dot_dimension_numbers<[1], [0], [0], [1], [0, 0, 1, 1], [], []>} : vector<16x128xf32>, vector<128x256xf32>, vector<16x256xf32> -> vector<16x256xf32>
    %c0_4 = arith.constant 0 : index
    %c0_5 = arith.constant 0 : index
    %6 = vector.load %arg4[%c0_4, %c0_5] : memref<1x256xf32, #tpu.memory_space<vmem>>, vector<1x256xf32>
    %7 = vector.broadcast %6 : vector<1x256xf32> to vector<16x256xf32>
    %8 = arith.addf %5, %7 : vector<16x256xf32>
    %cst_6 = arith.constant 0.000000e+00 : f32
    %9 = vector.broadcast %cst_6 : f32 to vector<16x256xf32>
    %10 = arith.maximumf %8, %9 : vector<16x256xf32>
    %c0_7 = arith.constant 0 : index
    %c0_8 = arith.constant 0 : index
    %11 = vector.load %arg8[%c0_7, %c0_8] : memref<16x128xf32, #tpu.memory_space<vmem>>, vector<16x128xf32>
    %c0_9 = arith.constant 0 : index
    %c0_10 = arith.constant 0 : index
    %12 = vector.load %arg5[%c0_9, %c0_10] : memref<256x128xf32, #tpu.memory_space<vmem>>, vector<256x128xf32>
    %cst_11 = arith.constant dense<0.000000e+00> : vector<16x128xf32>
    %13 = tpu.matmul %10, %12, %cst_11 {dimension_numbers = #tpu.dot_dimension_numbers<[1], [0], [0], [1], [0, 0, 1, 1], [], []>} : vector<16x256xf32>, vector<256x128xf32>, vector<16x128xf32> -> vector<16x128xf32>
    %14 = arith.addf %11, %13 : vector<16x128xf32>
    %c0_12 = arith.constant 0 : index
    %c0_13 = arith.constant 0 : index
    %15 = vector.load %arg8[%c0_12, %c0_13] : memref<16x128xf32, #tpu.memory_space<vmem>>, vector<16x128xf32>
    tpu.vector_store %arg8[%c0_12, %c0_13], %14 {strides = array<i32>} : memref<16x128xf32, #tpu.memory_space<vmem>>, vector<16x128xf32>,
    %c0_i32_14 = arith.constant 0 : i32
    %16 = arith.cmpi eq, %arg1, %c0_i32_14 : i32
    %17 = arith.extui %16 : i1 to i32
    %c0_i32_15 = arith.constant 0 : i32
    %18 = arith.cmpi ne, %17, %c0_i32_15 : i32
    scf.if %18 {
      %c0_16 = arith.constant 0 : index
      %c0_17 = arith.constant 0 : index
      %19 = vector.load %arg8[%c0_16, %c0_17] : memref<16x128xf32, #tpu.memory_space<vmem>>, vector<16x128xf32>
      %c0_18 = arith.constant 0 : index
      %c0_19 = arith.constant 0 : index
      %20 = vector.load %arg7[%c0_18, %c0_19] : memref<16x128xf32, #tpu.memory_space<vmem>>, vector<16x128xf32>
      tpu.vector_store %arg7[%c0_18, %c0_19], %19 {strides = array<i32>} : memref<16x128xf32, #tpu.memory_space<vmem>>, vector<16x128xf32>,
    } else {
    }
    return
  }
  func.func @transform_0(%arg0: i32, %arg1: i32) -> (i32, i32) {
    %c0_i32 = arith.constant 0 : i32
    %c0_i32_0 = arith.constant 0 : i32
    return %arg0, %c0_i32 : i32, i32
  }
  func.func @transform_1(%arg0: i32, %arg1: i32) -> (i32, i32) {
    %c0_i32 = arith.constant 0 : i32
    %c0_i32_0 = arith.constant 0 : i32
    return %c0_i32, %arg1 : i32, i32
  }
  func.func @transform_2(%arg0: i32, %arg1: i32) -> (i32, i32) {
    %c0_i32 = arith.constant 0 : i32
    %c0_i32_0 = arith.constant 0 : i32
    return %c0_i32, %arg1 : i32, i32
  }
  func.func @transform_3(%arg0: i32, %arg1: i32) -> (i32, i32) {
    %c0_i32 = arith.constant 0 : i32
    %c0_i32_0 = arith.constant 0 : i32
    return %arg1, %c0_i32 : i32, i32
  }
  func.func @transform_4(%arg0: i32, %arg1: i32) -> (i32, i32) {
    %c0_i32 = arith.constant 0 : i32
    %c0_i32_0 = arith.constant 0 : i32
    %c0_i32_1 = arith.constant 0 : i32
    return %c0_i32, %c0_i32_0 : i32, i32
  }
  func.func @transform_5(%arg0: i32, %arg1: i32) -> (i32, i32) {
    %c0_i32 = arith.constant 0 : i32
    %c0_i32_0 = arith.constant 0 : i32
    return %arg0, %c0_i32 : i32, i32
  }
}

</mosaic_0001>

<llo_original>
// kernel: tpu_custom_call.1
$region0: #{tpu_custom_call.1}
  #allocation0 [shape = 'u32[]', space=smem, size = 0x4, offset = 0x4, fixed_abs, tag = 'smem constant byte address 0x4 - core index']
  #allocation1 [shape = 'u32[144,128]{1,0:T(1,128)}', space=vmem, size = 0x12000, scoped, tag = 'internal scratch']
  #allocation2 [shape = 'f32[16,128]{1,0:T(8,128)}', space=vmem, size = 0x2000, scoped, tag = 'scratch operand']
  %s0 = inlined_call_operand.hbm [shape: f32[16,128], index: 0, kind: input, shape index: {}]
  %s1 = inlined_call_operand.hbm [shape: f32[128,256], index: 1, kind: input, shape index: {}]
  %s2 = inlined_call_operand.vmem [shape: f32[1,256], index: 2, kind: input, shape index: {}]
  %s3 = inlined_call_operand.hbm [shape: f32[256,128], index: 3, kind: input, shape index: {}]
  %s4 = inlined_call_operand.vmem [shape: f32[1,128], index: 4, kind: input, shape index: {}]
  %s5 = inlined_call_operand.hbm [shape: f32[16,128], index: 5, kind: output, shape index: {}]
  %s6 = sld [smem:[#allocation0]]
  $region50: #{tpu_custom_call.1} parent=0
    _
  %s8 = ssub.s32 1, %s6
  %s9 = scalar_select 0, %s8, %s6
  $region1: #{tpu_custom_call.1} parent=0
    #allocation3 [shape = 'u8[8192]{0}', space=vmem, size = 0x2000, scoped, tag = 'input window, operand 0, single buffered']
    #allocation4 [shape = 's32[1]{0}', space=sflag, size = 0x4, scoped, tag = 'scoped memory for tpu_custom_call.1']
    #allocation5 [shape = 's32[1]{0}', space=sflag, size = 0x4, scoped, tag = 'scoped memory for tpu_custom_call.1']
    #allocation6 [shape = 'u8[131072]{0}', space=vmem, size = 0x20000, scoped, tag = 'input window, operand 1, single buffered']
    #allocation7 [shape = 's32[1]{0}', space=sflag, size = 0x4, scoped, tag = 'scoped memory for tpu_custom_call.1']
    #allocation8 [shape = 'u8[131072]{0}', space=vmem, size = 0x20000, scoped, tag = 'input window, operand 3, single buffered']
    #allocation9 [shape = 'u8[8192]{0}', space=vmem, size = 0x2000, scoped, tag = 'output window, operand 0, single buffered']
    %10 = vsyncpa [#allocation4], 0
    %11 = vsyncpa [#allocation7], 0
    %12 = vsyncpa [#allocation5], 0
    // Predicated region
    $region2: #{tpu_custom_call.1} parent=1 // pred_check
      _
    $region3: #{tpu_custom_call.1} parent=1 // pred_check_branch
      %14 = sbr.rel (0) target = $region5
    $region4: #{tpu_custom_call.1} parent=1 // pred_region
      %s16 = ssub.s32 256, 256
      %17 = vsyncadd [#allocation4], %s16
      %s18 = sshll.u32 [#allocation3], 4
      %s19 = int_to_ptr.vmem [resolvable:$true] %s18
      %24 = dma.hbm_to_vmem [thread:$0]  %s0, 256, %s19, [#allocation4], 128, 128, 8
    $region5: #{tpu_custom_call.1} parent=1 // pred_fallthru
      _
    // Predicated region
    $region6: #{tpu_custom_call.1} parent=1 // pred_check
      _
    $region7: #{tpu_custom_call.1} parent=1 // pred_check_branch
      %26 = sbr.rel (0) target = $region9
    $region8: #{tpu_custom_call.1} parent=1 // pred_region
      %s28 = ssub.s32 4096, 4096
      %29 = vsyncadd [#allocation7], %s28
      %s30 = sshll.u32 [#allocation6], 4
      %s31 = int_to_ptr.vmem [resolvable:$true] %s30
      %36 = dma.hbm_to_vmem [thread:$0]  %s1, 4096, %s31, [#allocation7], 256, 256, 16
    $region9: #{tpu_custom_call.1} parent=1 // pred_fallthru
      _
    // Predicated region
    $region10: #{tpu_custom_call.1} parent=1 // pred_check
      _
    $region11: #{tpu_custom_call.1} parent=1 // pred_check_branch
      %38 = sbr.rel (0) target = $region13
    $region12: #{tpu_custom_call.1} parent=1 // pred_region
      _
    $region13: #{tpu_custom_call.1} parent=1 // pred_fallthru
      _
    // Predicated region
    $region14: #{tpu_custom_call.1} parent=1 // pred_check
      _
    $region15: #{tpu_custom_call.1} parent=1 // pred_check_branch
      %40 = sbr.rel (0) target = $region17
    $region16: #{tpu_custom_call.1} parent=1 // pred_region
      %s42 = ssub.s32 4096, 4096
      %43 = vsyncadd [#allocation7], %s42
      %s44 = sshll.u32 [#allocation8], 4
      %s45 = int_to_ptr.vmem [resolvable:$true] %s44
      %50 = dma.hbm_to_vmem [thread:$0]  %s3, 4096, %s45, [#allocation7], 128, 128, 8
    $region17: #{tpu_custom_call.1} parent=1 // pred_fallthru
      _
    // Predicated region
    $region18: #{tpu_custom_call.1} parent=1 // pred_check
      _
    $region19: #{tpu_custom_call.1} parent=1 // pred_check_branch
      %52 = sbr.rel (0) target = $region21
    $region20: #{tpu_custom_call.1} parent=1 // pred_region
      _
    $region21: #{tpu_custom_call.1} parent=1 // pred_fallthru
      _
    // Predicated region
    $region22: #{tpu_custom_call.1} parent=1 // pred_check
      _
    $region23: #{tpu_custom_call.1} parent=1 // pred_check_branch
      %54 = sbr.rel (0) target = $region25
    $region24: #{tpu_custom_call.1} parent=1 // pred_region
      %55 = dma.done [#allocation4], 256
    $region25: #{tpu_custom_call.1} parent=1 // pred_fallthru
      _
    // Predicated region
    $region26: #{tpu_custom_call.1} parent=1 // pred_check
      _
    $region27: #{tpu_custom_call.1} parent=1 // pred_check_branch
      %57 = sbr.rel (0) target = $region29
    $region28: #{tpu_custom_call.1} parent=1 // pred_region
      %58 = dma.done [#allocation7], 4096
    $region29: #{tpu_custom_call.1} parent=1 // pred_fallthru
      _
    // Predicated region
    $region30: #{tpu_custom_call.1} parent=1 // pred_check
      _
    $region31: #{tpu_custom_call.1} parent=1 // pred_check_branch
      %60 = sbr.rel (0) target = $region33
    $region32: #{tpu_custom_call.1} parent=1 // pred_region
      %61 = dma.done [#allocation7], 4096
    $region33: #{tpu_custom_call.1} parent=1 // pred_fallthru
      _
    %p62 = scmp.eq.s32.totalorder 0, 0
    // Predicated region
    $region34: #{tpu_custom_call.1} parent=1 // pred_check
      %p63 = pneg %p62
    $region35: #{tpu_custom_call.1} parent=1 // pred_check_branch
      %65 = sbr.rel (%p63) target = $region37
    $region36: #{tpu_custom_call.1} parent=1 // pred_region
      %v66 = vld [vmem:[%s4] sm:$0x1]
      %v68 = vlaneseq
      %v69 = vshrl.u32 %v68, 7
      %v70 = vsub.s32 0, %v69
      %v71 = vrot.slane %v66, %v70
      %73 = vst [vmem:[#allocation2] sm:$0xff] %v71
      %74 = vst [vmem:[#allocation2 + $0x8] sm:$0xff] %v71
    $region37: #{tpu_custom_call.1} parent=1 // pred_fallthru
      _
    %v75 = vld [vmem:[#allocation3] sm:$0xff]
    %v76 = vld [vmem:[#allocation3 + $0x8] sm:$0xff]
    %v77 = vld [vmem:[#allocation6] sm:$0xff]
    %v78 = vld [vmem:[#allocation6 + $0x8] sm:$0xff]
    %v79 = vld [vmem:[#allocation6 + $0x10] sm:$0xff]
    %v80 = vld [vmem:[#allocation6 + $0x18] sm:$0xff]
    %v81 = vld [vmem:[#allocation6 + $0x20] sm:$0xff]
    %v82 = vld [vmem:[#allocation6 + $0x28] sm:$0xff]
    %v83 = vld [vmem:[#allocation6 + $0x30] sm:$0xff]
    %v84 = vld [vmem:[#allocation6 + $0x38] sm:$0xff]
    %v85 = vld [vmem:[#allocation6 + $0x40] sm:$0xff]
    %v86 = vld [vmem:[#allocation6 + $0x48] sm:$0xff]
    %v87 = vld [vmem:[#allocation6 + $0x50] sm:$0xff]
    %v88 = vld [vmem:[#allocation6 + $0x58] sm:$0xff]
    %v89 = vld [vmem:[#allocation6 + $0x60] sm:$0xff]
    %v90 = vld [vmem:[#allocation6 + $0x68] sm:$0xff]
    %v91 = vld [vmem:[#allocation6 + $0x70] sm:$0xff]
    %v92 = vld [vmem:[#allocation6 + $0x78] sm:$0xff]
    %v93 = vld [vmem:[#allocation6 + $0x80] sm:$0xff]
    %v94 = vld [vmem:[#allocation6 + $0x88] sm:$0xff]
    %v95 = vld [vmem:[#allocation6 + $0x90] sm:$0xff]
    %v96 = vld [vmem:[#allocation6 + $0x98] sm:$0xff]
    %v97 = vld [vmem:[#allocation6 + $0xa0] sm:$0xff]
    %v98 = vld [vmem:[#allocation6 + $0xa8] sm:$0xff]
    %v99 = vld [vmem:[#allocation6 + $0xb0] sm:$0xff]
    %v100 = vld [vmem:[#allocation6 + $0xb8] sm:$0xff]
    %v101 = vld [vmem:[#allocation6 + $0xc0] sm:$0xff]
    %v102 = vld [vmem:[#allocation6 + $0xc8] sm:$0xff]
    %v103 = vld [vmem:[#allocation6 + $0xd0] sm:$0xff]
    %v104 = vld [vmem:[#allocation6 + $0xd8] sm:$0xff]
    %v105 = vld [vmem:[#allocation6 + $0xe0] sm:$0xff]
    %v106 = vld [vmem:[#allocation6 + $0xe8] sm:$0xff]
    %v107 = vld [vmem:[#allocation6 + $0xf0] sm:$0xff]
    %v108 = vld [vmem:[#allocation6 + $0xf8] sm:$0xff]
    %v109 = vld [vmem:[%s2] sm:$0x3]
    %v111 = vlaneseq
    %v112 = vshrl.u32 %v111, 7
    %v113 = vsub.s32 0, %v112
    %v114 = vrot.slane %v109, %v113
    %v115 = vlaneseq
    %v116 = vshrl.u32 %v115, 7
    %v117 = vsub.s32 1, %v116
    %v118 = vrot.slane %v109, %v117
    %121 = vmatprep.subr.mxu0 %v78
    %122 = vmatpush1.msra.mxu0 %v77
    %123 = vmatprep.subr.mxu0 %v80
    %124 = vmatpush1.msra.mxu0 %v79
    %125 = vmatprep.subr.mxu0 %v82
    %126 = vmatpush1.msra.mxu0 %v81
    %127 = vmatprep.subr.mxu0 %v84
    %128 = vmatpush1.msra.mxu0 %v83
    %129 = vmatprep.subr.mxu0 %v86
    %130 = vmatpush1.msra.mxu0 %v85
    %131 = vmatprep.subr.mxu0 %v88
    %132 = vmatpush1.msra.mxu0 %v87
    %133 = vmatprep.subr.mxu0 %v90
    %134 = vmatpush1.msra.mxu0 %v89
    %135 = vmatprep.subr.mxu0 %v92
    %136 = vmatpush1.msra.mxu0 %v91
    %137 = vmatprep.subr.mxu0 %v94
    %138 = vmatpush1.msra.mxu0 %v93
    %139 = vmatprep.subr.mxu0 %v96
    %140 = vmatpush1.msra.mxu0 %v95
    %141 = vmatprep.subr.mxu0 %v98
    %142 = vmatpush1.msra.mxu0 %v97
    %143 = vmatprep.subr.mxu0 %v100
    %144 = vmatpush1.msra.mxu0 %v99
    %145 = vmatprep.subr.mxu0 %v102
    %146 = vmatpush1.msra.mxu0 %v101
    %147 = vmatprep.subr.mxu0 %v104
    %148 = vmatpush1.msra.mxu0 %v103
    %149 = vmatprep.subr.mxu0 %v106
    %150 = vmatpush1.msra.mxu0 %v105
    %151 = vmatprep.subr.mxu0 %v108
    %152 = vmatpush1.msra.mxu0 %v107
    %153 = vmatprep.subr.mxu0 0.0
    %154 = vmatpush1.msra.mxu0 0.0
    %155 = vmatprep.subr.mxu0 0.0
    %156 = vmatpush1.msra.mxu0 0.0
    %157 = vmatprep.subr.mxu0 0.0
    %158 = vmatpush1.msra.mxu0 0.0
    %159 = vmatprep.subr.mxu0 0.0
    %160 = vmatpush1.msra.mxu0 0.0
    %161 = vmatprep.subr.mxu0 0.0
    %162 = vmatpush1.msra.mxu0 0.0
    %163 = vmatprep.subr.mxu0 0.0
    %164 = vmatpush1.msra.mxu0 0.0
    %165 = vmatprep.subr.mxu0 0.0
    %166 = vmatpush1.msra.mxu0 0.0
    %167 = vmatprep.subr.mxu0 0.0
    %168 = vmatpush1.msra.mxu0 0.0
    %169 = vmatprep.subr.mxu0 0.0
    %170 = vmatpush1.msra.mxu0 0.0
    %171 = vmatprep.subr.mxu0 0.0
    %172 = vmatpush1.msra.mxu0 0.0
    %173 = vmatprep.subr.mxu0 0.0
    %174 = vmatpush1.msra.mxu0 0.0
    %175 = vmatprep.subr.mxu0 0.0
    %176 = vmatpush1.msra.mxu0 0.0
    %177 = vmatprep.subr.mxu0 0.0
    %178 = vmatpush1.msra.mxu0 0.0
    %179 = vmatprep.subr.mxu0 0.0
    %180 = vmatpush1.msra.mxu0 0.0
    %181 = vmatprep.subr.mxu0 0.0
    %182 = vmatpush1.msra.mxu0 0.0
    %183 = vmatprep.subr.mxu0 0.0
    %184 = vmatpush1.msra.mxu0 0.0
    %185 = vmatprep.mubr.f32.mxu0 0.0
    %186 = vmatmul.mubr.f32.gmra.mrb[0].mxu0 %v75
    %v187 = vpop.f32.mrb[0].mxu0
    %v188 = vadd.f32 %v114, %v187
    %v189 = vpop.f32.mrb[0].mxu0
    %v190 = vadd.f32 %v118, %v189
    %191 = vmatprep.mubr.f32.mxu0 0.0
    %192 = vmatmul.mubr.f32.gmra.mrb[0].mxu0 %v76
    %v193 = vpop.f32.mrb[0].mxu0
    %v194 = vadd.f32 %v114, %v193
    %v195 = vpop.f32.mrb[0].mxu0
    %v196 = vadd.f32 %v118, %v195
    %197 = vdwg.mxu0
    %v198 = vmax.f32 %v188, 0.0
    %v199 = vmax.f32 %v190, 0.0
    %v200 = vmax.f32 %v194, 0.0
    %v201 = vmax.f32 %v196, 0.0
    %v202 = vld [vmem:[#allocation2] sm:$0xff]
    %v203 = vld [vmem:[#allocation2 + $0x8] sm:$0xff]
    %v204 = vld [vmem:[#allocation8] sm:$0xff]
    %v205 = vld [vmem:[#allocation8 + $0x8] sm:$0xff]
    %v206 = vld [vmem:[#allocation8 + $0x10] sm:$0xff]
    %v207 = vld [vmem:[#allocation8 + $0x18] sm:$0xff]
    %v208 = vld [vmem:[#allocation8 + $0x20] sm:$0xff]
    %v209 = vld [vmem:[#allocation8 + $0x28] sm:$0xff]
    %v210 = vld [vmem:[#allocation8 + $0x30] sm:$0xff]
    %v211 = vld [vmem:[#allocation8 + $0x38] sm:$0xff]
    %v212 = vld [vmem:[#allocation8 + $0x40] sm:$0xff]
    %v213 = vld [vmem:[#allocation8 + $0x48] sm:$0xff]
    %v214 = vld [vmem:[#allocation8 + $0x50] sm:$0xff]
    %v215 = vld [vmem:[#allocation8 + $0x58] sm:$0xff]
    %v216 = vld [vmem:[#allocation8 + $0x60] sm:$0xff]
    %v217 = vld [vmem:[#allocation8 + $0x68] sm:$0xff]
    %v218 = vld [vmem:[#allocation8 + $0x70] sm:$0xff]
    %v219 = vld [vmem:[#allocation8 + $0x78] sm:$0xff]
    %v220 = vld [vmem:[#allocation8 + $0x80] sm:$0xff]
    %v221 = vld [vmem:[#allocation8 + $0x88] sm:$0xff]
    %v222 = vld [vmem:[#allocation8 + $0x90] sm:$0xff]
    %v223 = vld [vmem:[#allocation8 + $0x98] sm:$0xff]
    %v224 = vld [vmem:[#allocation8 + $0xa0] sm:$0xff]
    %v225 = vld [vmem:[#allocation8 + $0xa8] sm:$0xff]
    %v226 = vld [vmem:[#allocation8 + $0xb0] sm:$0xff]
    %v227 = vld [vmem:[#allocation8 + $0xb8] sm:$0xff]
    %v228 = vld [vmem:[#allocation8 + $0xc0] sm:$0xff]
    %v229 = vld [vmem:[#allocation8 + $0xc8] sm:$0xff]
    %v230 = vld [vmem:[#allocation8 + $0xd0] sm:$0xff]
    %v231 = vld [vmem:[#allocation8 + $0xd8] sm:$0xff]
    %v232 = vld [vmem:[#allocation8 + $0xe0] sm:$0xff]
    %v233 = vld [vmem:[#allocation8 + $0xe8] sm:$0xff]
    %v234 = vld [vmem:[#allocation8 + $0xf0] sm:$0xff]
    %v235 = vld [vmem:[#allocation8 + $0xf8] sm:$0xff]
    %236 = vmatprep.subr.mxu0 0.0
    %237 = vmatpush1.msra.mxu0 %v204
    %238 = vmatprep.subr.mxu0 0.0
    %239 = vmatpush1.msra.mxu0 %v205
    %240 = vmatprep.subr.mxu0 0.0
    %241 = vmatpush1.msra.mxu0 %v206
    %242 = vmatprep.subr.mxu0 0.0
    %243 = vmatpush1.msra.mxu0 %v207
    %244 = vmatprep.subr.mxu0 0.0
    %245 = vmatpush1.msra.mxu0 %v208
    %246 = vmatprep.subr.mxu0 0.0
    %247 = vmatpush1.msra.mxu0 %v209
    %248 = vmatprep.subr.mxu0 0.0
    %249 = vmatpush1.msra.mxu0 %v210
    %250 = vmatprep.subr.mxu0 0.0
    %251 = vmatpush1.msra.mxu0 %v211
    %252 = vmatprep.subr.mxu0 0.0
    %253 = vmatpush1.msra.mxu0 %v212
    %254 = vmatprep.subr.mxu0 0.0
    %255 = vmatpush1.msra.mxu0 %v213
    %256 = vmatprep.subr.mxu0 0.0
    %257 = vmatpush1.msra.mxu0 %v214
    %258 = vmatprep.subr.mxu0 0.0
    %259 = vmatpush1.msra.mxu0 %v215
    %260 = vmatprep.subr.mxu0 0.0
    %261 = vmatpush1.msra.mxu0 %v216
    %262 = vmatprep.subr.mxu0 0.0
    %263 = vmatpush1.msra.mxu0 %v217
    %264 = vmatprep.subr.mxu0 0.0
    %265 = vmatpush1.msra.mxu0 %v218
    %266 = vmatprep.subr.mxu0 0.0
    %267 = vmatpush1.msra.mxu0 %v219
    %268 = vmatprep.subr.mxu0 0.0
    %269 = vmatpush1.msra.mxu0 %v220
    %270 = vmatprep.subr.mxu0 0.0
    %271 = vmatpush1.msra.mxu0 %v221
    %272 = vmatprep.subr.mxu0 0.0
    %273 = vmatpush1.msra.mxu0 %v222
    %274 = vmatprep.subr.mxu0 0.0
    %275 = vmatpush1.msra.mxu0 %v223
    %276 = vmatprep.subr.mxu0 0.0
    %277 = vmatpush1.msra.mxu0 %v224
    %278 = vmatprep.subr.mxu0 0.0
    %279 = vmatpush1.msra.mxu0 %v225
    %280 = vmatprep.subr.mxu0 0.0
    %281 = vmatpush1.msra.mxu0 %v226
    %282 = vmatprep.subr.mxu0 0.0
    %283 = vmatpush1.msra.mxu0 %v227
    %284 = vmatprep.subr.mxu0 0.0
    %285 = vmatpush1.msra.mxu0 %v228
    %286 = vmatprep.subr.mxu0 0.0
    %287 = vmatpush1.msra.mxu0 %v229
    %288 = vmatprep.subr.mxu0 0.0
    %289 = vmatpush1.msra.mxu0 %v230
    %290 = vmatprep.subr.mxu0 0.0
    %291 = vmatpush1.msra.mxu0 %v231
    %292 = vmatprep.subr.mxu0 0.0
    %293 = vmatpush1.msra.mxu0 %v232
    %294 = vmatprep.subr.mxu0 0.0
    %295 = vmatpush1.msra.mxu0 %v233
    %296 = vmatprep.subr.mxu0 0.0
    %297 = vmatpush1.msra.mxu0 %v234
    %298 = vmatprep.subr.mxu0 0.0
    %299 = vmatpush1.msra.mxu0 %v235
    %300 = vmatprep.mubr.f32.mxu0 %v199
    %301 = vmatmul.mubr.f32.gmra.mrb[0].mxu0 %v198
    %v302 = vpop.f32.mrb[0].mxu0
    %v303 = vadd.f32 0.0, %v302
    %v304 = vpop.f32.mrb[0].mxu0
    %305 = vmatprep.mubr.f32.mxu0 %v201
    %306 = vmatmul.mubr.f32.gmra.mrb[0].mxu0 %v200
    %v307 = vpop.f32.mrb[0].mxu0
    %v308 = vadd.f32 0.0, %v307
    %v309 = vpop.f32.mrb[0].mxu0
    %310 = vdwg.mxu0
    %v311 = vadd.f32 %v202, %v303
    %v312 = vadd.f32 %v203, %v308
    %313 = vst [vmem:[#allocation2] sm:$0xff] %v311
    %314 = vst [vmem:[#allocation2 + $0x8] sm:$0xff] %v312
    // Predicated region
    $region38: #{tpu_custom_call.1} parent=1 // pred_check
      %p315 = pneg %p62
    $region39: #{tpu_custom_call.1} parent=1 // pred_check_branch
      %317 = sbr.rel (%p315) target = $region41
    $region40: #{tpu_custom_call.1} parent=1 // pred_region
      %v318 = vld [vmem:[#allocation2] sm:$0xff]
      %v319 = vld [vmem:[#allocation2 + $0x8] sm:$0xff]
      %320 = vst [vmem:[#allocation9] sm:$0xff] %v318
      %321 = vst [vmem:[#allocation9 + $0x8] sm:$0xff] %v319
    $region41: #{tpu_custom_call.1} parent=1 // pred_fallthru
      _
    // Predicated region
    $region42: #{tpu_custom_call.1} parent=1 // pred_check
      _
    $region43: #{tpu_custom_call.1} parent=1 // pred_check_branch
      %323 = sbr.rel (0) target = $region45
    $region44: #{tpu_custom_call.1} parent=1 // pred_region
      %s325 = ssub.s32 256, 256
      %326 = vsyncadd [#allocation5], %s325
      %s327 = sshll.u32 [#allocation9], 4
      %s328 = int_to_ptr.vmem [resolvable:$true] %s327
      %333 = dma.vmem_to_hbm [thread:$0]  %s328, 256, %s5, [#allocation5], 128, 128, 8
    $region45: #{tpu_custom_call.1} parent=1 // pred_fallthru
      _
    // Predicated region
    $region46: #{tpu_custom_call.1} parent=1 // pred_check
      _
    $region47: #{tpu_custom_call.1} parent=1 // pred_check_branch
      %335 = sbr.rel (0) target = $region49
    $region48: #{tpu_custom_call.1} parent=1 // pred_region
      %336 = dma.done [#allocation5], 256
    $region49: #{tpu_custom_call.1} parent=1 // pred_fallthru
      _
    %337 = vsyncpa [#allocation4], 1
    %338 = vsyncpa [#allocation7], 1
    %339 = vsyncpa [#allocation5], 1

</llo_original>
